<compile_context>
chip_gen: v7x
topology: tpu7x:2x2x1
jax: 0.10.0
libtpu: 0.0.40
codegen_flags: <defaults>
</compile_context>

<pallas_src>
import functools

import jax
import jax.numpy as jnp
from jax.experimental import pallas as pl
from jax.experimental.pallas import tpu as pltpu


def _intensity_reducing_kernel(x_ref, o_ref, *, degree_f, out_dtype):
    # Pure elementwise VPU work. Cast (if any) is fused here; degree_f is a
    # Python float immediate.
    x = x_ref[...]
    if x.dtype != out_dtype:
        x = x.astype(out_dtype)
    o_ref[...] = x / degree_f


def _min_sublane(dtype):
    # Minimum second-to-last tile dim: 8 for 4-byte, 16 for 2-byte, 32 for 1-byte.
    itemsize = jnp.dtype(dtype).itemsize
    return max(8, 32 // max(itemsize, 1))


def intensity_reducing(x, degree=2, *, target_block_bytes=4 * 1024 * 1024):
    """Pallas implementation of IntensityReducing.forward: x / float(degree)."""
    orig_shape = x.shape
    degree_f = float(degree)

    in_dtype = x.dtype
    # PyTorch `x / float(degree)` keeps floating dtypes, promotes ints to f32.
    out_dtype = in_dtype if jnp.issubdtype(in_dtype, jnp.floating) else jnp.float32
    in_is = jnp.dtype(in_dtype).itemsize
    out_is = jnp.dtype(out_dtype).itemsize
    sub = max(_min_sublane(in_dtype), _min_sublane(out_dtype))

    total = x.size
    x_flat = jnp.reshape(x, (-1,))

    # Pick a wide, lane-dense last dim (multiple of 128). Prefer widths that
    # divide the flattened size (no tail at all) and give at least one full
    # sublane of rows.
    width = None
    fallback = None
    for w in (4096, 2048, 1024, 512, 256, 128):
        if total % w == 0:
            if fallback is None:
                fallback = w
            if total // w >= sub:
                width = w
                break
    if width is None:
        width = fallback if fallback is not None else 1024

    rows = total // width
    residual = total - rows * width

    if rows == 0:
        # Tiny input (< one lane row): plain XLA elementwise is the right tool.
        return (x_flat.astype(out_dtype) / degree_f).reshape(orig_shape)

    if residual:
        # Rare ragged case: only the < width leftover elements take the XLA path.
        x_main = x_flat[: rows * width]
        x_tail = x_flat[rows * width:]
    else:
        x_main = x_flat
        x_tail = None
    x2d = jnp.reshape(x_main, (rows, width))

    # Block rows: ~target_block_bytes per (largest-dtype) block.
    if rows <= sub:
        tr = rows  # full-extent second-to-last dim is always legal
    else:
        tr = max(sub, min(rows, target_block_bytes // (width * max(in_is, out_is))))
        tr = max(sub, (tr // sub) * sub)
        # Ensure >= 2 grid steps so v7x megacore has work for both TCs
        # (neutral on single-TC v5e/v6e).
        half = ((rows + 1) // 2 + sub - 1) // sub * sub
        tr = min(tr, max(sub, half))
    grid = (pl.cdiv(rows, tr),)

    # Scoped-VMEM budget derived from the actual double-buffered in+out block
    # footprint (+25% and a fixed cushion), clamped to a portable range so it
    # works under v5e's 16 MiB default and v7x's 64 MiB physical VMEM.
    block_pair_bytes = tr * width * (in_is + out_is)
    vmem_limit = int(min(max(block_pair_bytes * 2 * 5 // 4 + (2 << 20), 16 << 20),
                         48 << 20))

    kernel = functools.partial(
        _intensity_reducing_kernel, degree_f=degree_f, out_dtype=out_dtype
    )

    out2d = pl.pallas_call(
        kernel,
        out_shape=jax.ShapeDtypeStruct((rows, width), out_dtype),
        grid=grid,
        in_specs=[pl.BlockSpec((tr, width), lambda i: (i, 0))],
        out_specs=pl.BlockSpec((tr, width), lambda i: (i, 0)),
        compiler_params=pltpu.CompilerParams(
            dimension_semantics=("parallel",),
            vmem_limit_bytes=vmem_limit,
        ),
    )(x2d)

    out_flat = jnp.reshape(out2d, (-1,))
    if x_tail is not None:
        out_tail = x_tail.astype(out_dtype) / degree_f
        out_flat = jnp.concatenate([out_flat, out_tail])
    return jnp.reshape(out_flat, orig_shape)


if __name__ == "__main__":
    key = jax.random.PRNGKey(0)
    degree = 2

    # NCHW input, small shapes: batch=2, channels=4, spatial=16x16
    x = jax.random.normal(key, (2, 4, 16, 16), dtype=jnp.float32)
    out = jax.block_until_ready(intensity_reducing(x, degree=degree))
    expected = x / float(degree)
    assert out.shape == x.shape
    assert out.dtype == x.dtype
    assert jnp.allclose(out, expected, atol=1e-6, rtol=1e-6)

    # Also exercise the ragged-tail path (odd spatial dims).
    x_odd = jax.random.normal(jax.random.PRNGKey(1), (2, 4, 17, 17), dtype=jnp.float32)
    out_odd = jax.block_until_ready(intensity_reducing(x_odd, degree=degree))
    assert out_odd.shape == x_odd.shape
    assert jnp.allclose(out_odd, x_odd / float(degree), atol=1e-6, rtol=1e-6)

    print("KERNEL_OK")
</pallas_src>

<mosaic_0001>
module attributes {stable_mosaic.version = 11 : i64} {
  func.func @_intensity_reducing_kernel(%arg0: i32, %arg1: memref<8x256xf32, #tpu.memory_space<vmem>>, %arg2: memref<8x256xf32, #tpu.memory_space<vmem>>) attributes {dimension_semantics = [#tpu.dimension_semantics<parallel>], iteration_bounds = array<i64: 1>, scalar_prefetch = 0 : i64, scratch_operands = 0 : i64, tpu.core_type = #tpu.core_type<tc>, window_params = [{transform_indices = @transform_0, window_bounds = array<i64: 8, 256>}, {transform_indices = @transform_1, window_bounds = array<i64: 8, 256>}]} {
    %c0 = arith.constant 0 : index
    %c0_0 = arith.constant 0 : index
    %0 = vector.load %arg1[%c0, %c0_0] : memref<8x256xf32, #tpu.memory_space<vmem>>, vector<8x256xf32>
    %cst = arith.constant 2.000000e+00 : f32
    %1 = vector.broadcast %cst : f32 to vector<8x256xf32>
    %2 = arith.divf %0, %1 : vector<8x256xf32>
    %c0_1 = arith.constant 0 : index
    %c0_2 = arith.constant 0 : index
    %3 = vector.load %arg2[%c0_1, %c0_2] : memref<8x256xf32, #tpu.memory_space<vmem>>, vector<8x256xf32>
    tpu.vector_store %arg2[%c0_1, %c0_2], %2 {strides = array<i32>} : memref<8x256xf32, #tpu.memory_space<vmem>>, vector<8x256xf32>,
    return
  }
  func.func @transform_0(%arg0: i32) -> (i32, i32) {
    %c0_i32 = arith.constant 0 : i32
    %c0_i32_0 = arith.constant 0 : i32
    return %arg0, %c0_i32 : i32, i32
  }
  func.func @transform_1(%arg0: i32) -> (i32, i32) {
    %c0_i32 = arith.constant 0 : i32
    %c0_i32_0 = arith.constant 0 : i32
    return %arg0, %c0_i32 : i32, i32
  }
}

</mosaic_0001>

<llo_original>
// kernel: tpu_custom_call.1
$region0: #{tpu_custom_call.1}
  #allocation0 [shape = 'u32[]', space=smem, size = 0x4, offset = 0x4, fixed_abs, tag = 'smem constant byte address 0x4 - core index']
  #allocation1 [shape = 'u32[144,128]{1,0:T(1,128)}', space=vmem, size = 0x12000, scoped, tag = 'internal scratch']
  %s0 = inlined_call_operand.hbm [shape: f32[8,256], index: 0, kind: input, shape index: {}]
  %s1 = inlined_call_operand.hbm [shape: f32[8,256], index: 1, kind: output, shape index: {}]
  %s2 = sld [smem:[#allocation0]]
  $region18: #{tpu_custom_call.1} parent=0
    _
  %s4 = ssub.s32 1, %s2
  %s5 = scalar_select 0, %s4, %s2
  $region1: #{tpu_custom_call.1} parent=0
    #allocation2 [shape = 'u8[8192]{0}', space=vmem, size = 0x2000, scoped, tag = 'input window, operand 0, single buffered']
    #allocation3 [shape = 's32[1]{0}', space=sflag, size = 0x4, scoped, tag = 'scoped memory for tpu_custom_call.1']
    #allocation4 [shape = 's32[1]{0}', space=sflag, size = 0x4, scoped, tag = 'scoped memory for tpu_custom_call.1']
    #allocation5 [shape = 'u8[8192]{0}', space=vmem, size = 0x2000, scoped, tag = 'output window, operand 0, single buffered']
    %6 = vsyncpa [#allocation3], 0
    %7 = vsyncpa [#allocation4], 0
    // Predicated region
    $region2: #{tpu_custom_call.1} parent=1 // pred_check
      _
    $region3: #{tpu_custom_call.1} parent=1 // pred_check_branch
      %9 = sbr.rel (0) target = $region5
    $region4: #{tpu_custom_call.1} parent=1 // pred_region
      %s11 = ssub.s32 256, 256
      %12 = vsyncadd [#allocation3], %s11
      %s14 = sshll.u32 [#allocation2], 4
      %s15 = int_to_ptr.vmem [resolvable:$true] %s14
      %17 = dma.hbm_to_vmem [thread:$0]  %s0, 256, %s15, [#allocation3]
    $region5: #{tpu_custom_call.1} parent=1 // pred_fallthru
      _
    // Predicated region
    $region6: #{tpu_custom_call.1} parent=1 // pred_check
      _
    $region7: #{tpu_custom_call.1} parent=1 // pred_check_branch
      %19 = sbr.rel (0) target = $region9
    $region8: #{tpu_custom_call.1} parent=1 // pred_region
      %20 = dma.done [#allocation3], 256
    $region9: #{tpu_custom_call.1} parent=1 // pred_fallthru
      _
    %v21 = vld [vmem:[#allocation2] sm:$0xff]
    %v22 = vld [vmem:[#allocation2 + $0x8] sm:$0xff]
    %v23 = vrcp.pop 2.0
    %v24 = vmul.f32 %v21, %v23
    %v25 = vmul.f32 %v22, %v23
    %26 = vst [vmem:[#allocation5] sm:$0xff] %v24
    %27 = vst [vmem:[#allocation5 + $0x8] sm:$0xff] %v25
    // Predicated region
    $region10: #{tpu_custom_call.1} parent=1 // pred_check
      _
    $region11: #{tpu_custom_call.1} parent=1 // pred_check_branch
      %29 = sbr.rel (0) target = $region13
    $region12: #{tpu_custom_call.1} parent=1 // pred_region
      %s31 = ssub.s32 256, 256
      %32 = vsyncadd [#allocation4], %s31
      %s34 = sshll.u32 [#allocation5], 4
      %s35 = int_to_ptr.vmem [resolvable:$true] %s34
      %37 = dma.vmem_to_hbm [thread:$0]  %s35, 256, %s1, [#allocation4]
    $region13: #{tpu_custom_call.1} parent=1 // pred_fallthru
      _
    // Predicated region
    $region14: #{tpu_custom_call.1} parent=1 // pred_check
      _
    $region15: #{tpu_custom_call.1} parent=1 // pred_check_branch
      %39 = sbr.rel (0) target = $region17
    $region16: #{tpu_custom_call.1} parent=1 // pred_region
      %40 = dma.done [#allocation4], 256
    $region17: #{tpu_custom_call.1} parent=1 // pred_fallthru
      _
    %41 = vsyncpa [#allocation3], 1
    %42 = vsyncpa [#allocation4], 1

</llo_original>
